<compile_context>
chip_gen: v7x
topology: tpu7x:2x2x1
jax: 0.10.0
libtpu: 0.0.40
codegen_flags: <defaults>
</compile_context>

<pallas_src>
import jax
import jax.numpy as jnp
from jax.experimental import pallas as pl
from jax.experimental.pallas import tpu as pltpu

EPS = 1e-5


def _bn_sigmoid(y, gamma, beta):
    """BatchNorm1d (biased, training-mode batch stats over axis 0) + sigmoid.

    y: (B, tn) f32 with the FULL batch resident; gamma/beta: (1, tn) f32.
    """
    inv_b = 1.0 / y.shape[0]
    mean = jnp.sum(y, axis=0, keepdims=True) * inv_b        # (1, tn)
    c = y - mean                                            # reuse centered value
    var = jnp.sum(c * c, axis=0, keepdims=True) * inv_b     # (1, tn)
    # Fold gamma into the rsqrt scale: one broadcast FMA instead of two muls.
    scale = gamma * jax.lax.rsqrt(var + EPS)                # rsqrt -> EUP
    z = c * scale + beta
    # sigmoid(z) = 0.5*(tanh(z/2)+1): a single EUP transcendental.
    return 0.5 * (jnp.tanh(0.5 * z) + 1.0)


def slp_kernel(x_ref, w_ref, gamma_ref, beta_ref, o_ref):
    """Fast path: no K tiling. One MXU matmul + unconditional epilogue."""
    y = jnp.dot(x_ref[...], w_ref[...], preferred_element_type=jnp.float32)
    o_ref[...] = _bn_sigmoid(y, gamma_ref[...], beta_ref[...]).astype(o_ref.dtype)


def slp_kernel_ktiled(x_ref, w_ref, gamma_ref, beta_ref, o_ref, acc_ref):
    """Fallback: K-tiled matmul with f32 VMEM accumulator, epilogue on last k."""
    k = pl.program_id(1)

    @pl.when(k == 0)
    def _():
        acc_ref[...] = jnp.zeros_like(acc_ref)

    acc_ref[...] += jnp.dot(x_ref[...], w_ref[...],
                            preferred_element_type=jnp.float32)

    @pl.when(k == pl.num_programs(1) - 1)
    def _():
        o_ref[...] = _bn_sigmoid(acc_ref[...], gamma_ref[...],
                                 beta_ref[...]).astype(o_ref.dtype)


def _vmem_capacity_bytes():
    try:
        return int(pltpu.get_tpu_info().vmem_capacity_bytes)
    except Exception:
        return 64 * 1024 * 1024  # conservative (v7x per-TC VMEM)


def _divisor_candidates(dim, cands):
    out = [c for c in cands if dim % c == 0]
    return out if out else [dim]


def slp_forward(x, w_t, gamma, beta, *, use_bf16=False, tn=None, tk=None,
                force_ktiled=False, vmem_limit_bytes=None):
    """x: (B, in_dim); w_t: (in_dim, out_dim) (pre-transposed Linear weight,
    transpose folded into init so the output stays lane-dense); gamma/beta:
    (out_dim,) BatchNorm1d affine params. Returns sigmoid(BN(x @ w_t))."""
    B, in_dim = x.shape
    in_dim_w, out_dim = w_t.shape
    assert in_dim_w == in_dim

    out_dtype = x.dtype
    out_bytes = jnp.dtype(out_dtype).itemsize

    if vmem_limit_bytes is None:
        cap = _vmem_capacity_bytes()
        # ~75% of physical, capped at 96 MiB (128 MiB on v5e/v6e, 64 on v7x).
        vmem_limit_bytes = min(cap * 3 // 4, 96 * 1024 * 1024)
    budget = int(vmem_limit_bytes * 0.85)

    op_dtype = jnp.bfloat16 if use_bf16 else x.dtype
    op_bytes = jnp.dtype(op_dtype).itemsize
    x_op = x.astype(op_dtype)
    w_op = w_t.astype(op_dtype)

    gamma2 = gamma.reshape(1, out_dim).astype(jnp.float32)
    beta2 = beta.reshape(1, out_dim).astype(jnp.float32)

    # ---------------- fast path: no K grid axis ----------------
    def nok_vmem(tn_):
        # double-buffered x, w, gamma/beta, out (conservative).
        return (2 * B * in_dim * op_bytes + 2 * in_dim * tn_ * op_bytes
                + 4 * tn_ * 4 + 2 * B * tn_ * out_bytes)

    tn_cands = _divisor_candidates(out_dim, (1024, 512, 256, 128))

    if not force_ktiled:
        if tn is None:
            fitting = [c for c in tn_cands if nok_vmem(c) <= budget]
            # Prefer >= 2 feature tiles so the "parallel" axis can shard
            # across both v7x TensorCores; otherwise largest fitting tile.
            multi = [c for c in fitting if out_dim // c >= 2]
            tn_nok = max(multi) if multi else (max(fitting) if fitting else None)
        else:
            tn_nok = tn if out_dim % tn == 0 else None

        if tn_nok is not None:
            return pl.pallas_call(
                slp_kernel,
                out_shape=jax.ShapeDtypeStruct((B, out_dim), out_dtype),
                grid_spec=pltpu.PrefetchScalarGridSpec(
                    num_scalar_prefetch=0,
                    grid=(out_dim // tn_nok,),
                    in_specs=[
                        # x is grid-invariant: DMA'd once, not per feature tile.
                        pl.BlockSpec((B, in_dim), lambda n: (0, 0)),
                        pl.BlockSpec((in_dim, tn_nok), lambda n: (0, n)),
                        pl.BlockSpec((1, tn_nok), lambda n: (0, n)),
                        pl.BlockSpec((1, tn_nok), lambda n: (0, n)),
                    ],
                    out_specs=pl.BlockSpec((B, tn_nok), lambda n: (0, n)),
                ),
                compiler_params=pltpu.CompilerParams(
                    dimension_semantics=("parallel",),
                    vmem_limit_bytes=int(vmem_limit_bytes),
                ),
            )(x_op, w_op, gamma2, beta2)

    # ---------------- fallback: K-tiled accumulator path ----------------
    def kt_vmem(tn_, tk_):
        return (2 * B * tk_ * op_bytes + 2 * tk_ * tn_ * op_bytes
                + 4 * tn_ * 4 + 2 * B * tn_ * out_bytes + B * tn_ * 4)

    tn_cands_kt = _divisor_candidates(out_dim, (512, 256, 128))
    tk_cands = _divisor_candidates(in_dim, (512, 256, 128))

    if tn is None or tk is None:
        tn_sel, tk_sel = tn_cands_kt[-1], tk_cands[-1]
        done = False
        for tn_c in tn_cands_kt:
            for tk_c in tk_cands:
                if kt_vmem(tn_c, tk_c) <= budget:
                    tn_sel, tk_sel = tn_c, tk_c
                    done = True
                    break
            if done:
                break
        tn = tn if tn is not None else tn_sel
        tk = tk if tk is not None else tk_sel

    assert out_dim % tn == 0 and in_dim % tk == 0
    # NOTE: the batch axis is intentionally never tiled (BN needs full batch).

    return pl.pallas_call(
        slp_kernel_ktiled,
        out_shape=jax.ShapeDtypeStruct((B, out_dim), out_dtype),
        grid_spec=pltpu.PrefetchScalarGridSpec(
            num_scalar_prefetch=0,
            grid=(out_dim // tn, in_dim // tk),     # (feature tiles, K tiles)
            in_specs=[
                pl.BlockSpec((B, tk), lambda n, k: (0, k)),      # x
                pl.BlockSpec((tk, tn), lambda n, k: (k, n)),     # w_t
                pl.BlockSpec((1, tn), lambda n, k: (0, n)),      # gamma
                pl.BlockSpec((1, tn), lambda n, k: (0, n)),      # beta
            ],
            out_specs=pl.BlockSpec((B, tn), lambda n, k: (0, n)),
            scratch_shapes=[pltpu.VMEM((B, tn), jnp.float32)],
        ),
        compiler_params=pltpu.CompilerParams(
            dimension_semantics=("parallel", "arbitrary"),
            vmem_limit_bytes=int(vmem_limit_bytes),
        ),
    )(x_op, w_op, gamma2, beta2)


def slp_reference(x, w_t, gamma, beta):
    y = x @ w_t
    mean = jnp.mean(y, axis=0, keepdims=True)
    var = jnp.mean((y - mean) ** 2, axis=0, keepdims=True)
    y_hat = (y - mean) / jnp.sqrt(var + EPS)
    z = y_hat * gamma[None, :] + beta[None, :]
    return jax.nn.sigmoid(z)


if __name__ == "__main__":
    # Small but tile-able shapes: fast path picks tn=256 -> grid=(2,) with two
    # parallel feature tiles; the forced K-tiled path exercises grid=(2, 2).
    B, in_dim, out_dim = 64, 256, 512

    key = jax.random.PRNGKey(0)
    kx, kw = jax.random.split(key)

    x = jax.random.normal(kx, (B, in_dim), dtype=jnp.float32)
    # nn.Linear(in_dim, out_dim, bias=False): PyTorch stores (out_dim, in_dim);
    # we fold the transpose into init and store (in_dim, out_dim) directly.
    bound = 1.0 / jnp.sqrt(in_dim)
    w_t = jax.random.uniform(kw, (in_dim, out_dim), dtype=jnp.float32,
                             minval=-bound, maxval=bound)
    # BatchNorm1d affine params at PyTorch init: gamma=1, beta=0.
    gamma = jnp.ones((out_dim,), dtype=jnp.float32)
    beta = jnp.zeros((out_dim,), dtype=jnp.float32)

    ref = slp_reference(x, w_t, gamma, beta)

    # Fast path (no K axis), full f32 — tight agreement with the reference.
    out = slp_forward(x, w_t, gamma, beta)
    jax.block_until_ready(out)
    assert out.shape == (B, out_dim)
    assert jnp.allclose(out, ref, atol=1e-5, rtol=1e-5), \
        "fast-path kernel mismatch vs reference"

    # Forced K-tiled accumulator path (coverage of the fallback), f32.
    out_kt = slp_forward(x, w_t, gamma, beta, force_ktiled=True, tn=256, tk=128)
    jax.block_until_ready(out_kt)
    assert out_kt.shape == (B, out_dim)
    assert jnp.allclose(out_kt, ref, atol=1e-5, rtol=1e-5), \
        "K-tiled kernel mismatch vs reference"

    # bf16 operand cast (v6e/v7x weight-stream win); epilogue stays f32, so
    # only the matmul operands are quantized -> looser tolerance.
    out_bf16 = slp_forward(x, w_t, gamma, beta, use_bf16=True)
    jax.block_until_ready(out_bf16)
    assert out_bf16.shape == (B, out_dim)
    assert jnp.allclose(out_bf16, ref, atol=3e-2, rtol=0.0), \
        "bf16-operand kernel mismatch vs reference"

    print("KERNEL_OK")
</pallas_src>

<mosaic_0001>
module attributes {stable_mosaic.version = 11 : i64} {
  func.func @slp_kernel(%arg0: i32, %arg1: memref<64x256xf32, #tpu.memory_space<vmem>>, %arg2: memref<256x256xf32, #tpu.memory_space<vmem>>, %arg3: memref<1x256xf32, #tpu.memory_space<vmem>>, %arg4: memref<1x256xf32, #tpu.memory_space<vmem>>, %arg5: memref<64x256xf32, #tpu.memory_space<vmem>>) attributes {dimension_semantics = [#tpu.dimension_semantics<parallel>], iteration_bounds = array<i64: 2>, scalar_prefetch = 0 : i64, scratch_operands = 0 : i64, tpu.core_type = #tpu.core_type<tc>, window_params = [{pipeline_mode = #tpu.pipeline_mode<synchronous>, transform_indices = @transform_0, window_bounds = array<i64: 64, 256>}, {transform_indices = @transform_1, window_bounds = array<i64: 256, 256>}, {transform_indices = @transform_2, window_bounds = array<i64: 1, 256>}, {transform_indices = @transform_3, window_bounds = array<i64: 1, 256>}, {transform_indices = @transform_4, window_bounds = array<i64: 64, 256>}]} {
    %c0 = arith.constant 0 : index
    %c0_0 = arith.constant 0 : index
    %0 = vector.load %arg1[%c0, %c0_0] : memref<64x256xf32, #tpu.memory_space<vmem>>, vector<64x256xf32>
    %c0_1 = arith.constant 0 : index
    %c0_2 = arith.constant 0 : index
    %1 = vector.load %arg2[%c0_1, %c0_2] : memref<256x256xf32, #tpu.memory_space<vmem>>, vector<256x256xf32>
    %cst = arith.constant dense<0.000000e+00> : vector<64x256xf32>
    %2 = tpu.matmul %0, %1, %cst {dimension_numbers = #tpu.dot_dimension_numbers<[1], [0], [0], [1], [0, 0, 1, 1], [], []>} : vector<64x256xf32>, vector<256x256xf32>, vector<64x256xf32> -> vector<64x256xf32>
    %c0_3 = arith.constant 0 : index
    %c0_4 = arith.constant 0 : index
    %3 = vector.load %arg3[%c0_3, %c0_4] : memref<1x256xf32, #tpu.memory_space<vmem>>, vector<1x256xf32>
    %c0_5 = arith.constant 0 : index
    %c0_6 = arith.constant 0 : index
    %4 = vector.load %arg4[%c0_5, %c0_6] : memref<1x256xf32, #tpu.memory_space<vmem>>, vector<1x256xf32>
    %cst_7 = arith.constant dense<0.000000e+00> : vector<256xf32>
    %5 = vector.multi_reduction <add>, %2, %cst_7 [0] : vector<64x256xf32> to vector<256xf32>
    %6 = vector.shape_cast %5 : vector<256xf32> to vector<1x256xf32>
    %cst_8 = arith.constant 1.562500e-02 : f32
    %7 = vector.broadcast %cst_8 : f32 to vector<1x256xf32>
    %8 = arith.mulf %6, %7 : vector<1x256xf32>
    %9 = vector.broadcast %8 : vector<1x256xf32> to vector<64x256xf32>
    %10 = arith.subf %2, %9 : vector<64x256xf32>
    %11 = arith.mulf %10, %10 : vector<64x256xf32>
    %cst_9 = arith.constant dense<0.000000e+00> : vector<256xf32>
    %12 = vector.multi_reduction <add>, %11, %cst_9 [0] : vector<64x256xf32> to vector<256xf32>
    %13 = vector.shape_cast %12 : vector<256xf32> to vector<1x256xf32>
    %cst_10 = arith.constant 1.562500e-02 : f32
    %14 = vector.broadcast %cst_10 : f32 to vector<1x256xf32>
    %15 = arith.mulf %13, %14 : vector<1x256xf32>
    %cst_11 = arith.constant 9.99999974E-6 : f32
    %16 = vector.broadcast %cst_11 : f32 to vector<1x256xf32>
    %17 = arith.addf %15, %16 : vector<1x256xf32>
    %18 = math.rsqrt %17 : vector<1x256xf32>
    %19 = arith.mulf %3, %18 : vector<1x256xf32>
    %20 = vector.broadcast %19 : vector<1x256xf32> to vector<64x256xf32>
    %21 = arith.mulf %10, %20 : vector<64x256xf32>
    %22 = vector.broadcast %4 : vector<1x256xf32> to vector<64x256xf32>
    %23 = arith.addf %21, %22 : vector<64x256xf32>
    %cst_12 = arith.constant 5.000000e-01 : f32
    %24 = vector.broadcast %cst_12 : f32 to vector<64x256xf32>
    %25 = arith.mulf %24, %23 : vector<64x256xf32>
    %26 = math.tanh %25 : vector<64x256xf32>
    %cst_13 = arith.constant 1.000000e+00 : f32
    %27 = vector.broadcast %cst_13 : f32 to vector<64x256xf32>
    %28 = arith.addf %26, %27 : vector<64x256xf32>
    %cst_14 = arith.constant 5.000000e-01 : f32
    %29 = vector.broadcast %cst_14 : f32 to vector<64x256xf32>
    %30 = arith.mulf %29, %28 : vector<64x256xf32>
    %c0_15 = arith.constant 0 : index
    %c0_16 = arith.constant 0 : index
    %31 = vector.load %arg5[%c0_15, %c0_16] : memref<64x256xf32, #tpu.memory_space<vmem>>, vector<64x256xf32>
    tpu.vector_store %arg5[%c0_15, %c0_16], %30 {strides = array<i32>} : memref<64x256xf32, #tpu.memory_space<vmem>>, vector<64x256xf32>,
    return
  }
  func.func @transform_0(%arg0: i32) -> (i32, i32) {
    %c0_i32 = arith.constant 0 : i32
    %c0_i32_0 = arith.constant 0 : i32
    %c0_i32_1 = arith.constant 0 : i32
    return %c0_i32, %c0_i32_0 : i32, i32
  }
  func.func @transform_1(%arg0: i32) -> (i32, i32) {
    %c0_i32 = arith.constant 0 : i32
    %c0_i32_0 = arith.constant 0 : i32
    return %c0_i32, %arg0 : i32, i32
  }
  func.func @transform_2(%arg0: i32) -> (i32, i32) {
    %c0_i32 = arith.constant 0 : i32
    %c0_i32_0 = arith.constant 0 : i32
    return %c0_i32, %arg0 : i32, i32
  }
  func.func @transform_3(%arg0: i32) -> (i32, i32) {
    %c0_i32 = arith.constant 0 : i32
    %c0_i32_0 = arith.constant 0 : i32
    return %c0_i32, %arg0 : i32, i32
  }
  func.func @transform_4(%arg0: i32) -> (i32, i32) {
    %c0_i32 = arith.constant 0 : i32
    %c0_i32_0 = arith.constant 0 : i32
    return %c0_i32, %arg0 : i32, i32
  }
}

</mosaic_0001>

<llo_original>
// kernel: tpu_custom_call.1
$region0: #{tpu_custom_call.1}
  #allocation0 [shape = 'u32[]', space=smem, size = 0x4, offset = 0x4, fixed_abs, tag = 'smem constant byte address 0x4 - core index']
  #allocation1 [shape = 'u32[144,128]{1,0:T(1,128)}', space=vmem, size = 0x12000, scoped, tag = 'internal scratch']
  %s0 = inlined_call_operand.hbm [shape: f32[64,256], index: 0, kind: input, shape index: {}]
  %s1 = inlined_call_operand.hbm [shape: f32[256,512], index: 1, kind: input, shape index: {}]
  %s2 = inlined_call_operand.vmem [shape: f32[1,512], index: 2, kind: input, shape index: {}]
  %s3 = inlined_call_operand.vmem [shape: f32[1,512], index: 3, kind: input, shape index: {}]
  %s4 = inlined_call_operand.hbm [shape: f32[64,512], index: 4, kind: output, shape index: {}]
  %s5 = sld [smem:[#allocation0]]
  $region57: #{tpu_custom_call.1} parent=0
    _
  %s7 = ssub.s32 1, %s5
  %s8 = scalar_select 0, %s7, %s5
  $region1: #{tpu_custom_call.1} parent=0
    #allocation2 [shape = 'u8[65536]{0}', space=vmem, size = 0x10000, scoped, tag = 'input window, operand 0, single buffered']
    #allocation3 [shape = 's32[2]{0}', space=sflag, size = 0x8, scoped, tag = 'scoped memory for tpu_custom_call.1']
    #allocation4 [shape = 's32[2]{0}', space=sflag, size = 0x8, scoped, tag = 'scoped memory for tpu_custom_call.1']
    #allocation5 [shape = 'u8[524288]{0}', space=vmem, size = 0x80000, scoped, tag = 'input window, operand 1']
    #allocation6 [shape = 's32[2]{0}', space=sflag, size = 0x8, scoped, tag = 'scoped memory for tpu_custom_call.1']
    #allocation7 [shape = 'u8[131072]{0}', space=vmem, size = 0x20000, scoped, tag = 'output window, operand 0']
    %9 = vsyncpa [#allocation3], 0
    %10 = vsyncpa [#allocation6], 0
    %s11 = scalar_lea.sflag [#allocation6], 1
    %12 = vsyncpa %s11, 0
    %13 = vsyncpa [#allocation4], 0
    %s14 = scalar_lea.sflag [#allocation4], 1
    %15 = vsyncpa %s14, 0
    loop: start=0, step=1, limit=4
    $region2: #{tpu_custom_call.1} parent=1 // loop_pre_header
      _
    $region3: #{tpu_custom_call.1} parent=1 // loop_header
      %s17 = sphi 0, %s21
      %p18 = scmp.ge.s32.totalorder %s17, 4
      %s25 = sphi 0, %s25
      %s27 = sphi 0, %s25
      %s28 = sphi 0, %s27
      %s42 = sphi 0, %s28
      %s48 = sphi 0, %s50
      %s51 = sphi 0, %s48
      %s52 = sphi 0, %s51
      %s68 = sphi 0, %s52
      %s74 = sphi 0, %s76
      %s77 = sphi 0, %s74
      %s78 = sphi 0, %s77
      %s94 = sphi 0, %s78
      %s100 = sphi 0, %s102
      %s103 = sphi 0, %s100
      %s104 = sphi 0, %s103
      %s120 = sphi 0, %s104
      %s126 = sphi 0, %s128
      %s129 = sphi 0, %s126
      %s130 = sphi 0, %s129
      %s146 = sphi 0, %s130
    $region4: #{tpu_custom_call.1} parent=1 // loop_header_branch
      %20 = sbr.rel (%p18) target = $region8
    $region5: #{tpu_custom_call.1} parent=1 // loop_body
      %s22 = ssub.s32 %s17, 1
      %s23 = ssub.s32 %s17, 2
      %s24 = sadd.s32 %s17, 1
      %s26 = sadd.s32 %s25, 1
      %p29 = scmp.eq.s32.totalorder %s17, 1
      %p30 = scmp.ne.s32.totalorder %s25, %s27
      %p31 = scmp.eq.s32.totalorder %s17, 0
      %p32 = por %p30, %p31
      %p33 = scmp.ne.s32.totalorder %s25, %s27
      %p34 = scmp.eq.s32.totalorder %s22, 1
      %p35 = por %p33, %p34
      %p36 = scmp.ne.s32.totalorder %s27, %s28
      %p37 = scmp.eq.s32.totalorder %s22, 0
      %p38 = por %p36, %p37
      %p39 = scmp.ne.s32.totalorder %s27, %s28
      %p40 = scmp.eq.s32.totalorder %s23, 1
      %p41 = por %p39, %p40
      %p43 = scmp.ne.s32.totalorder %s28, %s42
      %p44 = scmp.eq.s32.totalorder %s23, 0
      %p45 = por %p43, %p44
      %s46 = ssub.s32 %s17, %s24
      %p47 = scmp.eq.s32.totalorder %s46, 0
      %s49 = sadd.s32 %s48, 1
      %s50 = scalar_select %p47, %s48, %s49
      %p53 = pneg %p47
      %p54 = scmp.eq.s32.totalorder %s17, 1
      %p55 = por %p53, %p54
      %p56 = scmp.ne.s32.totalorder %s48, %s51
      %p57 = scmp.eq.s32.totalorder %s17, 0
      %p58 = por %p56, %p57
      %p59 = scmp.ne.s32.totalorder %s48, %s51
      %p60 = scmp.eq.s32.totalorder %s22, 1
      %p61 = por %p59, %p60
      %p62 = scmp.ne.s32.totalorder %s51, %s52
      %p63 = scmp.eq.s32.totalorder %s22, 0
      %p64 = por %p62, %p63
      %p65 = scmp.ne.s32.totalorder %s51, %s52
      %p66 = scmp.eq.s32.totalorder %s23, 1
      %p67 = por %p65, %p66
      %p69 = scmp.ne.s32.totalorder %s52, %s68
      %p70 = scmp.eq.s32.totalorder %s23, 0
      %p71 = por %p69, %p70
      %s72 = ssub.s32 %s17, %s24
      %p73 = scmp.eq.s32.totalorder %s72, 0
      %s75 = sadd.s32 %s74, 1
      %s76 = scalar_select %p73, %s74, %s75
      %p79 = pneg %p73
      %p80 = scmp.eq.s32.totalorder %s17, 1
      %p81 = por %p79, %p80
      %p82 = scmp.ne.s32.totalorder %s74, %s77
      %p83 = scmp.eq.s32.totalorder %s17, 0
      %p84 = por %p82, %p83
      %p85 = scmp.ne.s32.totalorder %s74, %s77
      %p86 = scmp.eq.s32.totalorder %s22, 1
      %p87 = por %p85, %p86
      %p88 = scmp.ne.s32.totalorder %s77, %s78
      %p89 = scmp.eq.s32.totalorder %s22, 0
      %p90 = por %p88, %p89
      %p91 = scmp.ne.s32.totalorder %s77, %s78
      %p92 = scmp.eq.s32.totalorder %s23, 1
      %p93 = por %p91, %p92
      %p95 = scmp.ne.s32.totalorder %s78, %s94
      %p96 = scmp.eq.s32.totalorder %s23, 0
      %p97 = por %p95, %p96
      %s98 = ssub.s32 %s17, %s24
      %p99 = scmp.eq.s32.totalorder %s98, 0
      %s101 = sadd.s32 %s100, 1
      %s102 = scalar_select %p99, %s100, %s101
      %p105 = pneg %p99
      %p106 = scmp.eq.s32.totalorder %s17, 1
      %p107 = por %p105, %p106
      %p108 = scmp.ne.s32.totalorder %s100, %s103
      %p109 = scmp.eq.s32.totalorder %s17, 0
      %p110 = por %p108, %p109
      %p111 = scmp.ne.s32.totalorder %s100, %s103
      %p112 = scmp.eq.s32.totalorder %s22, 1
      %p113 = por %p111, %p112
      %p114 = scmp.ne.s32.totalorder %s103, %s104
      %p115 = scmp.eq.s32.totalorder %s22, 0
      %p116 = por %p114, %p115
      %p117 = scmp.ne.s32.totalorder %s103, %s104
      %p118 = scmp.eq.s32.totalorder %s23, 1
      %p119 = por %p117, %p118
      %p121 = scmp.ne.s32.totalorder %s104, %s120
      %p122 = scmp.eq.s32.totalorder %s23, 0
      %p123 = por %p121, %p122
      %s124 = ssub.s32 %s17, %s24
      %p125 = scmp.eq.s32.totalorder %s124, 0
      %s127 = sadd.s32 %s126, 1
      %s128 = scalar_select %p125, %s126, %s127
      %p131 = pneg %p125
      %p132 = scmp.eq.s32.totalorder %s17, 1
      %p133 = por %p131, %p132
      %p134 = scmp.ne.s32.totalorder %s126, %s129
      %p135 = scmp.eq.s32.totalorder %s17, 0
      %p136 = por %p134, %p135
      %p137 = scmp.ne.s32.totalorder %s126, %s129
      %p138 = scmp.eq.s32.totalorder %s22, 1
      %p139 = por %p137, %p138
      %p140 = scmp.ne.s32.totalorder %s129, %s130
      %p141 = scmp.eq.s32.totalorder %s22, 0
      %p142 = por %p140, %p141
      %p143 = scmp.ne.s32.totalorder %s129, %s130
      %p144 = scmp.eq.s32.totalorder %s23, 1
      %p145 = por %p143, %p144
      %p147 = scmp.ne.s32.totalorder %s130, %s146
      %p148 = scmp.eq.s32.totalorder %s23, 0
      %p149 = por %p147, %p148
      %p150 = scmp.le.s32.totalorder 1, %s17
      %p151 = scmp.lt.s32.totalorder %s17, 3
      %p152 = pnand %p150, %p151
      %p153 = pneg %p152
      // Predicated region
      $region9: #{tpu_custom_call.1} parent=5 // pred_check
        _
      $region10: #{tpu_custom_call.1} parent=5 // pred_check_branch
        %155 = sbr.rel (%p152) target = $region12
      $region11: #{tpu_custom_call.1} parent=5 // pred_region
        %s156 = ssub.s32 %s17, 1
        // Predicated region
        $region13: #{tpu_custom_call.1} parent=11 // pred_check
          %p157 = pneg %p38
        $region14: #{tpu_custom_call.1} parent=11 // pred_check_branch
          %159 = sbr.rel (%p157) target = $region16
        $region15: #{tpu_custom_call.1} parent=11 // pred_region
          %s161 = ssub.s32 2048, 2048
          %162 = vsyncadd [#allocation3], %s161
          %s163 = sshll.u32 [#allocation2], 4
          %s164 = int_to_ptr.vmem [resolvable:$true] %s163
          %169 = dma.hbm_to_vmem [thread:$0]  %s0, 2048, %s164, [#allocation3], 256, 256, 16
        $region16: #{tpu_custom_call.1} parent=11 // pred_fallthru
          _
      $region12: #{tpu_custom_call.1} parent=5 // pred_fallthru
        _
      %p170 = scmp.lt.s32.totalorder %s17, 2
      // Predicated region
      $region17: #{tpu_custom_call.1} parent=5 // pred_check
        %p171 = pneg %p170
      $region18: #{tpu_custom_call.1} parent=5 // pred_check_branch
        %173 = sbr.rel (%p171) target = $region20
      $region19: #{tpu_custom_call.1} parent=5 // pred_region
        // Predicated region
        $region21: #{tpu_custom_call.1} parent=19 // pred_check
          %p174 = pneg %p58
        $region22: #{tpu_custom_call.1} parent=19 // pred_check_branch
          %176 = sbr.rel (%p174) target = $region24
        $region23: #{tpu_custom_call.1} parent=19 // pred_region
          %s177 = sand.u32 %s48, 1
          %s178 = scalar_lea.sflag [#allocation6], %s177
          %s179 = sand.u32 %s48, 1
          %s180 = smul.addr %s179, 512
          %s181 = scalar_lea.vmem [#allocation5], %s180
          %s182 = smul.u32 2, %s17
          %s184 = ssub.s32 8192, 8192
          %185 = vsyncadd %s178, %s184
          %s186 = smul.addr %s182, 128
          %s187 = scalar_lea.hbm %s1, %s186
          %s188 = sshll.u32 %s181, 4
          %s189 = int_to_ptr.vmem [resolvable:$true] %s188
          %194 = dma.hbm_to_vmem [thread:$0]  %s187, 8192, %s189, %s178, 512, 256, 16
        $region24: #{tpu_custom_call.1} parent=19 // pred_fallthru
          _
        // Predicated region
        $region25: #{tpu_custom_call.1} parent=19 // pred_check
          %p195 = pneg %p84
        $region26: #{tpu_custom_call.1} parent=19 // pred_check_branch
          %197 = sbr.rel (%p195) target = $region28
        $region27: #{tpu_custom_call.1} parent=19 // pred_region
          %s198 = smul.u32 2, %s17
          %p199 = scmp.lt.s32.totalorder %s198, 3
          %s200 = scalar_select %p199, %s198, 3
          %s201 = scalar_lea.vmem %s2, %s200
          %s202 = smul.u32 2, %s17
        $region28: #{tpu_custom_call.1} parent=19 // pred_fallthru
          _
        // Predicated region
        $region29: #{tpu_custom_call.1} parent=19 // pred_check
          %p203 = pneg %p110
        $region30: #{tpu_custom_call.1} parent=19 // pred_check_branch
          %205 = sbr.rel (%p203) target = $region32
        $region31: #{tpu_custom_call.1} parent=19 // pred_region
          %s206 = smul.u32 2, %s17
          %p207 = scmp.lt.s32.totalorder %s206, 3
          %s208 = scalar_select %p207, %s206, 3
          %s209 = scalar_lea.vmem %s3, %s208
          %s210 = smul.u32 2, %s17
        $region32: #{tpu_custom_call.1} parent=19 // pred_fallthru
          _
      $region20: #{tpu_custom_call.1} parent=5 // pred_fallthru
        _
      %p211 = scmp.le.s32.totalorder 1, %s17
      %p212 = scmp.lt.s32.totalorder %s17, 3
      %p213 = pnand %p211, %p212
      %p214 = pneg %p213
      // Predicated region
      $region33: #{tpu_custom_call.1} parent=5 // pred_check
        _
      $region34: #{tpu_custom_call.1} parent=5 // pred_check_branch
        %216 = sbr.rel (%p213) target = $region36
      $region35: #{tpu_custom_call.1} parent=5 // pred_region
        %s217 = ssub.s32 %s17, 1
        // Predicated region
        $region37: #{tpu_custom_call.1} parent=35 // pred_check
          %p218 = pneg %p38
        $region38: #{tpu_custom_call.1} parent=35 // pred_check_branch
          %220 = sbr.rel (%p218) target = $region40
        $region39: #{tpu_custom_call.1} parent=35 // pred_region
          %221 = dma.done [#allocation3], 2048
        $region40: #{tpu_custom_call.1} parent=35 // pred_fallthru
          _
        %s222 = sand.u32 %s51, 1
        %s223 = scalar_lea.sflag [#allocation6], %s222
        %s224 = sand.u32 %s51, 1
        %s225 = smul.addr %s224, 512
        %s226 = scalar_lea.vmem [#allocation5], %s225
        // Predicated region
        $region41: #{tpu_custom_call.1} parent=35 // pred_check
          %p227 = pneg %p64
        $region42: #{tpu_custom_call.1} parent=35 // pred_check_branch
          %229 = sbr.rel (%p227) target = $region44
        $region43: #{tpu_custom_call.1} parent=35 // pred_region
          %230 = dma.done %s223, 8192
        $region44: #{tpu_custom_call.1} parent=35 // pred_fallthru
          _
        %p231 = pneg %p38
        %p232 = pneg %p35
        %s233 = sand.u32 %s51, 1
        %s234 = scalar_lea.sflag [#allocation6], %s233
        %s235 = sand.u32 %s51, 1
        %s236 = smul.addr %s235, 512
        %s237 = scalar_lea.vmem [#allocation5], %s236
        %p238 = pneg %p64
        %p239 = pneg %p61
        %s240 = smul.u32 2, %s22
        %p241 = scmp.lt.s32.totalorder %s240, 3
        %s242 = scalar_select %p241, %s240, 3
        %s243 = scalar_lea.vmem %s2, %s242
        %p244 = pneg %p90
        %p245 = pneg %p87
        %s246 = smul.u32 2, %s22
        %p247 = scmp.lt.s32.totalorder %s246, 3
        %s248 = scalar_select %p247, %s246, 3
        %s249 = scalar_lea.vmem %s3, %s248
        %p250 = pneg %p116
        %p251 = pneg %p113
        %p252 = pneg %p142
        %p253 = pneg %p139
        %s254 = sand.u32 %s129, 1
        %s255 = scalar_lea.sflag [#allocation4], %s254
        %s256 = sand.u32 %s129, 1
        %s257 = smul.addr %s256, 128
        %s258 = scalar_lea.vmem [#allocation7], %s257
        %s259 = smul.u32 2, %s22
        %s260 = smul.u32 2, %s22
        %p261 = scmp.lt.s32.totalorder %s260, 3
        %s262 = scalar_select %p261, %s260, 3
        %s263 = scalar_lea.vmem %s2, %s262
        %s264 = smul.u32 2, %s22
        %s265 = smul.u32 2, %s22
        %p266 = scmp.lt.s32.totalorder %s265, 3
        %s267 = scalar_select %p266, %s265, 3
        %s268 = scalar_lea.vmem %s3, %s267
        %s269 = smul.u32 2, %s22
        %s270 = smul.u32 2, %s22
        %v271 = vld [vmem:[#allocation2] sm:$0xff]
        %v272 = vld [vmem:[#allocation2 + $0x8] sm:$0xff]
        %v273 = vld [vmem:[#allocation2 + $0x10] sm:$0xff]
        %v274 = vld [vmem:[#allocation2 + $0x18] sm:$0xff]
        %v275 = vld [vmem:[#allocation2 + $0x20] sm:$0xff]
        %v276 = vld [vmem:[#allocation2 + $0x28] sm:$0xff]
        %v277 = vld [vmem:[#allocation2 + $0x30] sm:$0xff]
        %v278 = vld [vmem:[#allocation2 + $0x38] sm:$0xff]
        %v279 = vld [vmem:[#allocation2 + $0x40] sm:$0xff]
        %v280 = vld [vmem:[#allocation2 + $0x48] sm:$0xff]
        %v281 = vld [vmem:[#allocation2 + $0x50] sm:$0xff]
        %v282 = vld [vmem:[#allocation2 + $0x58] sm:$0xff]
        %v283 = vld [vmem:[#allocation2 + $0x60] sm:$0xff]
        %v284 = vld [vmem:[#allocation2 + $0x68] sm:$0xff]
        %v285 = vld [vmem:[#allocation2 + $0x70] sm:$0xff]
        %v286 = vld [vmem:[#allocation2 + $0x78] sm:$0xff]
        %v287 = vld [vmem:[%s226] sm:$0xff]
        %v288 = vld [vmem:[%s226 + $0x8] sm:$0xff]
        %v289 = vld [vmem:[%s226 + $0x10] sm:$0xff]
        %v290 = vld [vmem:[%s226 + $0x18] sm:$0xff]
        %v291 = vld [vmem:[%s226 + $0x20] sm:$0xff]
        %v292 = vld [vmem:[%s226 + $0x28] sm:$0xff]
        %v293 = vld [vmem:[%s226 + $0x30] sm:$0xff]
        %v294 = vld [vmem:[%s226 + $0x38] sm:$0xff]
        %v295 = vld [vmem:[%s226 + $0x40] sm:$0xff]
        %v296 = vld [vmem:[%s226 + $0x48] sm:$0xff]
        %v297 = vld [vmem:[%s226 + $0x50] sm:$0xff]
        %v298 = vld [vmem:[%s226 + $0x58] sm:$0xff]
        %v299 = vld [vmem:[%s226 + $0x60] sm:$0xff]
        %v300 = vld [vmem:[%s226 + $0x68] sm:$0xff]
        %v301 = vld [vmem:[%s226 + $0x70] sm:$0xff]
        %v302 = vld [vmem:[%s226 + $0x78] sm:$0xff]
        %v303 = vld [vmem:[%s226 + $0x80] sm:$0xff]
        %v304 = vld [vmem:[%s226 + $0x88] sm:$0xff]
        %v305 = vld [vmem:[%s226 + $0x90] sm:$0xff]
        %v306 = vld [vmem:[%s226 + $0x98] sm:$0xff]
        %v307 = vld [vmem:[%s226 + $0xa0] sm:$0xff]
        %v308 = vld [vmem:[%s226 + $0xa8] sm:$0xff]
        %v309 = vld [vmem:[%s226 + $0xb0] sm:$0xff]
        %v310 = vld [vmem:[%s226 + $0xb8] sm:$0xff]
        %v311 = vld [vmem:[%s226 + $0xc0] sm:$0xff]
        %v312 = vld [vmem:[%s226 + $0xc8] sm:$0xff]
        %v313 = vld [vmem:[%s226 + $0xd0] sm:$0xff]
        %v314 = vld [vmem:[%s226 + $0xd8] sm:$0xff]
        %v315 = vld [vmem:[%s226 + $0xe0] sm:$0xff]
        %v316 = vld [vmem:[%s226 + $0xe8] sm:$0xff]
        %v317 = vld [vmem:[%s226 + $0xf0] sm:$0xff]
        %v318 = vld [vmem:[%s226 + $0xf8] sm:$0xff]
        %v319 = vld [vmem:[%s226 + $0x100] sm:$0xff]
        %v320 = vld [vmem:[%s226 + $0x108] sm:$0xff]
        %v321 = vld [vmem:[%s226 + $0x110] sm:$0xff]
        %v322 = vld [vmem:[%s226 + $0x118] sm:$0xff]
        %v323 = vld [vmem:[%s226 + $0x120] sm:$0xff]
        %v324 = vld [vmem:[%s226 + $0x128] sm:$0xff]
        %v325 = vld [vmem:[%s226 + $0x130] sm:$0xff]
        %v326 = vld [vmem:[%s226 + $0x138] sm:$0xff]
        %v327 = vld [vmem:[%s226 + $0x140] sm:$0xff]
        %v328 = vld [vmem:[%s226 + $0x148] sm:$0xff]
        %v329 = vld [vmem:[%s226 + $0x150] sm:$0xff]
        %v330 = vld [vmem:[%s226 + $0x158] sm:$0xff]
        %v331 = vld [vmem:[%s226 + $0x160] sm:$0xff]
        %v332 = vld [vmem:[%s226 + $0x168] sm:$0xff]
        %v333 = vld [vmem:[%s226 + $0x170] sm:$0xff]
        %v334 = vld [vmem:[%s226 + $0x178] sm:$0xff]
        %v335 = vld [vmem:[%s226 + $0x180] sm:$0xff]
        %v336 = vld [vmem:[%s226 + $0x188] sm:$0xff]
        %v337 = vld [vmem:[%s226 + $0x190] sm:$0xff]
        %v338 = vld [vmem:[%s226 + $0x198] sm:$0xff]
        %v339 = vld [vmem:[%s226 + $0x1a0] sm:$0xff]
        %v340 = vld [vmem:[%s226 + $0x1a8] sm:$0xff]
        %v341 = vld [vmem:[%s226 + $0x1b0] sm:$0xff]
        %v342 = vld [vmem:[%s226 + $0x1b8] sm:$0xff]
        %v343 = vld [vmem:[%s226 + $0x1c0] sm:$0xff]
        %v344 = vld [vmem:[%s226 + $0x1c8] sm:$0xff]
        %v345 = vld [vmem:[%s226 + $0x1d0] sm:$0xff]
        %v346 = vld [vmem:[%s226 + $0x1d8] sm:$0xff]
        %v347 = vld [vmem:[%s226 + $0x1e0] sm:$0xff]
        %v348 = vld [vmem:[%s226 + $0x1e8] sm:$0xff]
        %v349 = vld [vmem:[%s226 + $0x1f0] sm:$0xff]
        %v350 = vld [vmem:[%s226 + $0x1f8] sm:$0xff]
        %351 = vmatprep.subr.mxu0 %v288
        %352 = vmatpush1.msra.mxu0 %v287
        %353 = vmatprep.subr.mxu0 %v290
        %354 = vmatpush1.msra.mxu0 %v289
        %355 = vmatprep.subr.mxu0 %v292
        %356 = vmatpush1.msra.mxu0 %v291
        %357 = vmatprep.subr.mxu0 %v294
        %358 = vmatpush1.msra.mxu0 %v293
        %359 = vmatprep.subr.mxu0 %v296
        %360 = vmatpush1.msra.mxu0 %v295
        %361 = vmatprep.subr.mxu0 %v298
        %362 = vmatpush1.msra.mxu0 %v297
        %363 = vmatprep.subr.mxu0 %v300
        %364 = vmatpush1.msra.mxu0 %v299
        %365 = vmatprep.subr.mxu0 %v302
        %366 = vmatpush1.msra.mxu0 %v301
        %367 = vmatprep.subr.mxu0 %v304
        %368 = vmatpush1.msra.mxu0 %v303
        %369 = vmatprep.subr.mxu0 %v306
        %370 = vmatpush1.msra.mxu0 %v305
        %371 = vmatprep.subr.mxu0 %v308
        %372 = vmatpush1.msra.mxu0 %v307
        %373 = vmatprep.subr.mxu0 %v310
        %374 = vmatpush1.msra.mxu0 %v309
        %375 = vmatprep.subr.mxu0 %v312
        %376 = vmatpush1.msra.mxu0 %v311
        %377 = vmatprep.subr.mxu0 %v314
        %378 = vmatpush1.msra.mxu0 %v313
        %379 = vmatprep.subr.mxu0 %v316
        %380 = vmatpush1.msra.mxu0 %v315
        %381 = vmatprep.subr.mxu0 %v318
        %382 = vmatpush1.msra.mxu0 %v317
        %383 = vmatprep.subr.mxu0 %v320
        %384 = vmatpush1.msra.mxu0 %v319
        %385 = vmatprep.subr.mxu0 %v322
        %386 = vmatpush1.msra.mxu0 %v321
        %387 = vmatprep.subr.mxu0 %v324
        %388 = vmatpush1.msra.mxu0 %v323
        %389 = vmatprep.subr.mxu0 %v326
        %390 = vmatpush1.msra.mxu0 %v325
        %391 = vmatprep.subr.mxu0 %v328
        %392 = vmatpush1.msra.mxu0 %v327
        %393 = vmatprep.subr.mxu0 %v330
        %394 = vmatpush1.msra.mxu0 %v329
        %395 = vmatprep.subr.mxu0 %v332
        %396 = vmatpush1.msra.mxu0 %v331
        %397 = vmatprep.subr.mxu0 %v334
        %398 = vmatpush1.msra.mxu0 %v333
        %399 = vmatprep.subr.mxu0 %v336
        %400 = vmatpush1.msra.mxu0 %v335
        %401 = vmatprep.subr.mxu0 %v338
        %402 = vmatpush1.msra.mxu0 %v337
        %403 = vmatprep.subr.mxu0 %v340
        %404 = vmatpush1.msra.mxu0 %v339
        %405 = vmatprep.subr.mxu0 %v342
        %406 = vmatpush1.msra.mxu0 %v341
        %407 = vmatprep.subr.mxu0 %v344
        %408 = vmatpush1.msra.mxu0 %v343
        %409 = vmatprep.subr.mxu0 %v346
        %410 = vmatpush1.msra.mxu0 %v345
        %411 = vmatprep.subr.mxu0 %v348
        %412 = vmatpush1.msra.mxu0 %v347
        %413 = vmatprep.subr.mxu0 %v350
        %414 = vmatpush1.msra.mxu0 %v349
        %415 = vmatprep.mubr.f32.mxu0 %v272
        %416 = vmatmul.mubr.f32.gmra.mrb[0].mxu0 %v271
        %v417 = vpop.f32.mrb[0].mxu0
        %v418 = vadd.f32 0.0, %v417
        %v419 = vpop.f32.mrb[0].mxu0
        %v420 = vadd.f32 0.0, %v419
        %421 = vmatprep.mubr.f32.mxu0 %v274
        %422 = vmatmul.mubr.f32.gmra.mrb[0].mxu0 %v273
        %v423 = vpop.f32.mrb[0].mxu0
        %v424 = vadd.f32 0.0, %v423
        %v425 = vpop.f32.mrb[0].mxu0
        %v426 = vadd.f32 0.0, %v425
        %427 = vmatprep.mubr.f32.mxu0 %v276
        %428 = vmatmul.mubr.f32.gmra.mrb[0].mxu0 %v275
        %v429 = vpop.f32.mrb[0].mxu0
        %v430 = vadd.f32 0.0, %v429
        %v431 = vpop.f32.mrb[0].mxu0
        %v432 = vadd.f32 0.0, %v431
        %433 = vmatprep.mubr.f32.mxu0 %v278
        %434 = vmatmul.mubr.f32.gmra.mrb[0].mxu0 %v277
        %v435 = vpop.f32.mrb[0].mxu0
        %v436 = vadd.f32 0.0, %v435
        %v437 = vpop.f32.mrb[0].mxu0
        %v438 = vadd.f32 0.0, %v437
        %439 = vmatprep.mubr.f32.mxu0 %v280
        %440 = vmatmul.mubr.f32.gmra.mrb[0].mxu0 %v279
        %v441 = vpop.f32.mrb[0].mxu0
        %v442 = vadd.f32 0.0, %v441
        %v443 = vpop.f32.mrb[0].mxu0
        %v444 = vadd.f32 0.0, %v443
        %445 = vmatprep.mubr.f32.mxu0 %v282
        %446 = vmatmul.mubr.f32.gmra.mrb[0].mxu0 %v281
        %v447 = vpop.f32.mrb[0].mxu0
        %v448 = vadd.f32 0.0, %v447
        %v449 = vpop.f32.mrb[0].mxu0
        %v450 = vadd.f32 0.0, %v449
        %451 = vmatprep.mubr.f32.mxu0 %v284
        %452 = vmatmul.mubr.f32.gmra.mrb[0].mxu0 %v283
        %v453 = vpop.f32.mrb[0].mxu0
        %v454 = vadd.f32 0.0, %v453
        %v455 = vpop.f32.mrb[0].mxu0
        %v456 = vadd.f32 0.0, %v455
        %457 = vmatprep.mubr.f32.mxu0 %v286
        %458 = vmatmul.mubr.f32.gmra.mrb[0].mxu0 %v285
        %v459 = vpop.f32.mrb[0].mxu0
        %v460 = vadd.f32 0.0, %v459
        %v461 = vpop.f32.mrb[0].mxu0
        %v462 = vadd.f32 0.0, %v461
        %463 = vdwg.mxu0
        %v464 = vld [vmem:[%s263] sm:$0x3]
        %v465 = vld [vmem:[%s268] sm:$0x3]
        %v466 = vadd.f32 %v418, %v424
        %v467 = vadd.f32 %v466, %v430
        %v468 = vadd.f32 %v467, %v436
        %v469 = vadd.f32 %v468, %v442
        %v470 = vadd.f32 %v469, %v448
        %v471 = vadd.f32 %v470, %v454
        %v472 = vadd.f32 %v471, %v460
        %v473 = vrot.slane %v472, 4
        %v474 = vadd.f32 %v472, %v473
        %v475 = vrot.slane %v474, 2
        %v476 = vadd.f32 %v474, %v475
        %v477 = vrot.slane %v476, 1
        %v478 = vadd.f32 %v476, %v477
        %v479 = vadd.f32 %v420, %v426
        %v480 = vadd.f32 %v479, %v432
        %v481 = vadd.f32 %v480, %v438
        %v482 = vadd.f32 %v481, %v444
        %v483 = vadd.f32 %v482, %v450
        %v484 = vadd.f32 %v483, %v456
        %v485 = vadd.f32 %v484, %v462
        %v486 = vrot.slane %v485, 4
        %v487 = vadd.f32 %v485, %v486
        %v488 = vrot.slane %v487, 2
        %v489 = vadd.f32 %v487, %v488
        %v490 = vrot.slane %v489, 1
        %v491 = vadd.f32 %v489, %v490
        %v492 = vmul.f32 %v478, 0.015625
        %v493 = vmul.f32 %v491, 0.015625
        %v494 = vsub.f32 %v418, %v492
        %v495 = vsub.f32 %v420, %v493
        %v496 = vsub.f32 %v424, %v492
        %v497 = vsub.f32 %v426, %v493
        %v498 = vsub.f32 %v430, %v492
        %v499 = vsub.f32 %v432, %v493
        %v500 = vsub.f32 %v436, %v492
        %v501 = vsub.f32 %v438, %v493
        %v502 = vsub.f32 %v442, %v492
        %v503 = vsub.f32 %v444, %v493
        %v504 = vsub.f32 %v448, %v492
        %v505 = vsub.f32 %v450, %v493
        %v506 = vsub.f32 %v454, %v492
        %v507 = vsub.f32 %v456, %v493
        %v508 = vsub.f32 %v460, %v492
        %v509 = vsub.f32 %v462, %v493
        %v510 = vmul.f32 %v494, %v494
        %v511 = vmul.f32 %v495, %v495
        %v512 = vmul.f32 %v496, %v496
        %v513 = vmul.f32 %v497, %v497
        %v514 = vmul.f32 %v498, %v498
        %v515 = vmul.f32 %v499, %v499
        %v516 = vmul.f32 %v500, %v500
        %v517 = vmul.f32 %v501, %v501
        %v518 = vmul.f32 %v502, %v502
        %v519 = vmul.f32 %v503, %v503
        %v520 = vmul.f32 %v504, %v504
        %v521 = vmul.f32 %v505, %v505
        %v522 = vmul.f32 %v506, %v506
        %v523 = vmul.f32 %v507, %v507
        %v524 = vmul.f32 %v508, %v508
        %v525 = vmul.f32 %v509, %v509
        %v526 = vadd.f32 %v510, %v512
        %v527 = vadd.f32 %v526, %v514
        %v528 = vadd.f32 %v527, %v516
        %v529 = vadd.f32 %v528, %v518
        %v530 = vadd.f32 %v529, %v520
        %v531 = vadd.f32 %v530, %v522
        %v532 = vadd.f32 %v531, %v524
        %v533 = vrot.slane %v532, 4
        %v534 = vadd.f32 %v532, %v533
        %v535 = vrot.slane %v534, 2
        %v536 = vadd.f32 %v534, %v535
        %v537 = vrot.slane %v536, 1
        %v538 = vadd.f32 %v536, %v537
        %v539 = vadd.f32 %v511, %v513
        %v540 = vadd.f32 %v539, %v515
        %v541 = vadd.f32 %v540, %v517
        %v542 = vadd.f32 %v541, %v519
        %v543 = vadd.f32 %v542, %v521
        %v544 = vadd.f32 %v543, %v523
        %v545 = vadd.f32 %v544, %v525
        %v546 = vrot.slane %v545, 4
        %v547 = vadd.f32 %v545, %v546
        %v548 = vrot.slane %v547, 2
        %v549 = vadd.f32 %v547, %v548
        %v550 = vrot.slane %v549, 1
        %v551 = vadd.f32 %v549, %v550
        %v552 = vmul.f32 %v538, 0.015625
        %v553 = vmul.f32 %v551, 0.015625
        %v554 = vadd.f32 %v552, 1e-05
        %v555 = vadd.f32 %v553, 1e-05
        %v556 = vrsqrt.pop %v554
        %v557 = vrsqrt.pop %v555
        %v560 = vcombine.low %v556, %v557
        %v562 = vunpack.c.l.s4 1966171168
        %v563 = vunpack.c.0.s8 %v562
        %v564 = vlaneseq
        %v565 = vshrl.u32 %v564, 7
        %v566 = vsub.s32 %v563, %v565
        %v567 = vrot.slane %v560, %v566
        %v569 = vunpack.c.l.s4 1966171168
        %v570 = vunpack.c.0.s8 %v569
        %v571 = vlaneseq
        %v572 = vshrl.u32 %v571, 7
        %v573 = vsub.s32 %v570, %v572
        %v574 = vrot.slane %v567, %v573
        %v576 = vmul.f32 %v464, %v574
        %v578 = vlaneseq
        %v579 = vshrl.u32 %v578, 7
        %v580 = vsub.s32 0, %v579
        %v581 = vrot.slane %v576, %v580
        %v582 = vlaneseq
        %v583 = vshrl.u32 %v582, 7
        %v584 = vsub.s32 1, %v583
        %v585 = vrot.slane %v576, %v584
        %v588 = vmul.f32 %v494, %v581
        %v589 = vmul.f32 %v495, %v585
        %v590 = vmul.f32 %v496, %v581
        %v591 = vmul.f32 %v497, %v585
        %v592 = vmul.f32 %v498, %v581
        %v593 = vmul.f32 %v499, %v585
        %v594 = vmul.f32 %v500, %v581
        %v595 = vmul.f32 %v501, %v585
        %v596 = vmul.f32 %v502, %v581
        %v597 = vmul.f32 %v503, %v585
        %v598 = vmul.f32 %v504, %v581
        %v599 = vmul.f32 %v505, %v585
        %v600 = vmul.f32 %v506, %v581
        %v601 = vmul.f32 %v507, %v585
        %v602 = vmul.f32 %v508, %v581
        %v603 = vmul.f32 %v509, %v585
        %v605 = vlaneseq
        %v606 = vshrl.u32 %v605, 7
        %v607 = vsub.s32 0, %v606
        %v608 = vrot.slane %v465, %v607
        %v609 = vlaneseq
        %v610 = vshrl.u32 %v609, 7
        %v611 = vsub.s32 1, %v610
        %v612 = vrot.slane %v465, %v611
        %v615 = vadd.f32 %v588, %v608
        %v616 = vadd.f32 %v589, %v612
        %v617 = vadd.f32 %v590, %v608
        %v618 = vadd.f32 %v591, %v612
        %v619 = vadd.f32 %v592, %v608
        %v620 = vadd.f32 %v593, %v612
        %v621 = vadd.f32 %v594, %v608
        %v622 = vadd.f32 %v595, %v612
        %v623 = vadd.f32 %v596, %v608
        %v624 = vadd.f32 %v597, %v612
        %v625 = vadd.f32 %v598, %v608
        %v626 = vadd.f32 %v599, %v612
        %v627 = vadd.f32 %v600, %v608
        %v628 = vadd.f32 %v601, %v612
        %v629 = vadd.f32 %v602, %v608
        %v630 = vadd.f32 %v603, %v612
        %v631 = vmul.f32 %v615, 0.5
        %v632 = vmul.f32 %v616, 0.5
        %v633 = vmul.f32 %v617, 0.5
        %v634 = vmul.f32 %v618, 0.5
        %v635 = vmul.f32 %v619, 0.5
        %v636 = vmul.f32 %v620, 0.5
        %v637 = vmul.f32 %v621, 0.5
        %v638 = vmul.f32 %v622, 0.5
        %v639 = vmul.f32 %v623, 0.5
        %v640 = vmul.f32 %v624, 0.5
        %v641 = vmul.f32 %v625, 0.5
        %v642 = vmul.f32 %v626, 0.5
        %v643 = vmul.f32 %v627, 0.5
        %v644 = vmul.f32 %v628, 0.5
        %v645 = vmul.f32 %v629, 0.5
        %v646 = vmul.f32 %v630, 0.5
        %v647 = vtanh.pop %v631
        %v648 = vtanh.pop %v632
        %v649 = vtanh.pop %v633
        %v650 = vtanh.pop %v634
        %v651 = vtanh.pop %v635
        %v652 = vtanh.pop %v636
        %v653 = vtanh.pop %v637
        %v654 = vtanh.pop %v638
        %v655 = vtanh.pop %v639
        %v656 = vtanh.pop %v640
        %v657 = vtanh.pop %v641
        %v658 = vtanh.pop %v642
        %v659 = vtanh.pop %v643
        %v660 = vtanh.pop %v644
        %v661 = vtanh.pop %v645
        %v662 = vtanh.pop %v646
        %v663 = vadd.f32 %v647, 1.0
        %v664 = vadd.f32 %v648, 1.0
        %v665 = vadd.f32 %v649, 1.0
        %v666 = vadd.f32 %v650, 1.0
        %v667 = vadd.f32 %v651, 1.0
        %v668 = vadd.f32 %v652, 1.0
        %v669 = vadd.f32 %v653, 1.0
        %v670 = vadd.f32 %v654, 1.0
        %v671 = vadd.f32 %v655, 1.0
        %v672 = vadd.f32 %v656, 1.0
        %v673 = vadd.f32 %v657, 1.0
        %v674 = vadd.f32 %v658, 1.0
        %v675 = vadd.f32 %v659, 1.0
        %v676 = vadd.f32 %v660, 1.0
        %v677 = vadd.f32 %v661, 1.0
        %v678 = vadd.f32 %v662, 1.0
        %v679 = vmul.f32 %v663, 0.5
        %v680 = vmul.f32 %v664, 0.5
        %v681 = vmul.f32 %v665, 0.5
        %v682 = vmul.f32 %v666, 0.5
        %v683 = vmul.f32 %v667, 0.5
        %v684 = vmul.f32 %v668, 0.5
        %v685 = vmul.f32 %v669, 0.5
        %v686 = vmul.f32 %v670, 0.5
        %v687 = vmul.f32 %v671, 0.5
        %v688 = vmul.f32 %v672, 0.5
        %v689 = vmul.f32 %v673, 0.5
        %v690 = vmul.f32 %v674, 0.5
        %v691 = vmul.f32 %v675, 0.5
        %v692 = vmul.f32 %v676, 0.5
        %v693 = vmul.f32 %v677, 0.5
        %v694 = vmul.f32 %v678, 0.5
        %695 = vst [vmem:[%s258] sm:$0xff] %v679
        %696 = vst [vmem:[%s258 + $0x8] sm:$0xff] %v680
        %697 = vst [vmem:[%s258 + $0x10] sm:$0xff] %v681
        %698 = vst [vmem:[%s258 + $0x18] sm:$0xff] %v682
        %699 = vst [vmem:[%s258 + $0x20] sm:$0xff] %v683
        %700 = vst [vmem:[%s258 + $0x28] sm:$0xff] %v684
        %701 = vst [vmem:[%s258 + $0x30] sm:$0xff] %v685
        %702 = vst [vmem:[%s258 + $0x38] sm:$0xff] %v686
        %703 = vst [vmem:[%s258 + $0x40] sm:$0xff] %v687
        %704 = vst [vmem:[%s258 + $0x48] sm:$0xff] %v688
        %705 = vst [vmem:[%s258 + $0x50] sm:$0xff] %v689
        %706 = vst [vmem:[%s258 + $0x58] sm:$0xff] %v690
        %707 = vst [vmem:[%s258 + $0x60] sm:$0xff] %v691
        %708 = vst [vmem:[%s258 + $0x68] sm:$0xff] %v692
        %709 = vst [vmem:[%s258 + $0x70] sm:$0xff] %v693
        %710 = vst [vmem:[%s258 + $0x78] sm:$0xff] %v694
        %s711 = sand.u32 %s129, 1
        %s712 = scalar_lea.sflag [#allocation4], %s711
        %s713 = sand.u32 %s129, 1
        %s714 = smul.addr %s713, 128
        %s715 = scalar_lea.vmem [#allocation7], %s714
        // Predicated region
        $region45: #{tpu_custom_call.1} parent=35 // pred_check
          %p716 = pneg %p139
        $region46: #{tpu_custom_call.1} parent=35 // pred_check_branch
          %718 = sbr.rel (%p716) target = $region48
        $region47: #{tpu_custom_call.1} parent=35 // pred_region
          %s719 = smul.u32 2, %s22
          %s721 = ssub.s32 2048, 2048
          %722 = vsyncadd %s712, %s721
          %s723 = smul.addr %s719, 128
          %s724 = scalar_lea.hbm %s4, %s723
          %s725 = sshll.u32 %s715, 4
          %s726 = int_to_ptr.vmem [resolvable:$true] %s725
          %731 = dma.vmem_to_hbm [thread:$0]  %s726, 2048, %s724, %s712, 256, 512, 16
        $region48: #{tpu_custom_call.1} parent=35 // pred_fallthru
          _
      $region36: #{tpu_custom_call.1} parent=5 // pred_fallthru
        _
      %p732 = scmp.le.s32.totalorder 2, %s17
      // Predicated region
      $region49: #{tpu_custom_call.1} parent=5 // pred_check
        %p733 = pneg %p732
      $region50: #{tpu_custom_call.1} parent=5 // pred_check_branch
        %735 = sbr.rel (%p733) target = $region52
      $region51: #{tpu_custom_call.1} parent=5 // pred_region
        %s736 = ssub.s32 %s17, 2
        // Predicated region
        $region53: #{tpu_custom_call.1} parent=51 // pred_check
          %p737 = pneg %p145
        $region54: #{tpu_custom_call.1} parent=51 // pred_check_branch
          %739 = sbr.rel (%p737) target = $region56
        $region55: #{tpu_custom_call.1} parent=51 // pred_region
          %s740 = sand.u32 %s130, 1
          %s741 = scalar_lea.sflag [#allocation4], %s740
          %s742 = sand.u32 %s130, 1
          %s743 = smul.addr %s742, 128
          %s744 = scalar_lea.vmem [#allocation7], %s743
          %745 = dma.done %s741, 2048
        $region56: #{tpu_custom_call.1} parent=51 // pred_fallthru
          _
      $region52: #{tpu_custom_call.1} parent=5 // pred_fallthru
        _
    $region6: #{tpu_custom_call.1} parent=1 // loop_footer
      %s21 = sadd.s32 1, %s17
    $region7: #{tpu_custom_call.1} parent=1 // loop_footer_branch
      %16 = sbr.rel target = $region3
    $region8: #{tpu_custom_call.1} parent=1 // loop_exit
      _
    %746 = vsyncpa [#allocation3], 1
    %s747 = scalar_lea.sflag [#allocation3], 1
    %748 = vsyncpa %s747, 1
    %749 = vsyncpa [#allocation6], 1
    %s750 = scalar_lea.sflag [#allocation6], 1
    %751 = vsyncpa %s750, 1
    %752 = vsyncpa [#allocation4], 1
    %s753 = scalar_lea.sflag [#allocation4], 1
    %754 = vsyncpa %s753, 1

</llo_original>
